<compile_context>
chip_gen: v5e
topology: v5e:2x2
jax: 0.10.0
libtpu: 0.0.40
codegen_flags: <defaults>
</compile_context>

<pallas_src>
import jax
import jax.numpy as jnp
from jax import lax
from jax.experimental import pallas as pl
from jax.experimental.pallas import tpu as pltpu


def attn_head_kernel(x_ref, wqkv_ref, o_ref):
    # x_ref: (B, L, D); wqkv_ref: (D, 3H); o_ref: (B, L, H)
    B, L, D = x_ref.shape
    H = o_ref.shape[-1]
    in_dtype = x_ref.dtype

    x = x_ref[...]                  # native dtype (bf16 stays bf16)
    w = wqkv_ref[...]

    # Fused QKV projection on the flattened (B*L, D) slab: one MXU push,
    # sublanes filled, f32 accumulation.
    qkv = jnp.dot(x.reshape(B * L, D), w,
                  preferred_element_type=jnp.float32)          # (B*L, 3H) f32
    qkv = qkv.reshape(B, L, 3 * H)

    q = qkv[:, :, 0 * H:1 * H].astype(in_dtype)                # (B, L, H)
    k = qkv[:, :, 1 * H:2 * H].astype(in_dtype)
    v = qkv[:, :, 2 * H:3 * H].astype(in_dtype)

    # Scaled scores (f32 accumulation): (B, L, L)
    s = jnp.einsum('bqh,bkh->bqk', q, k,
                   preferred_element_type=jnp.float32) * (H ** -0.5)

    # Causal mask as a single additive bias (one iota pair per call).
    row = lax.broadcasted_iota(jnp.int32, (L, L), 0)
    col = lax.broadcasted_iota(jnp.int32, (L, L), 1)
    bias = jnp.where(col <= row, 0.0, -1e30).astype(jnp.float32)
    s = s + bias[None, :, :]

    # Row-wise softmax in f32; masked columns underflow to exactly 0.
    m = jnp.max(s, axis=-1, keepdims=True)
    p = jnp.exp(s - m)
    denom = jnp.sum(p, axis=-1, keepdims=True)
    att = p * pl.reciprocal(denom)        # exact; approx=True if bit-match not needed

    # att @ V with operands in the input dtype, f32 accumulation.
    out = jnp.einsum('bqk,bkh->bqh', att.astype(in_dtype), v,
                     preferred_element_type=jnp.float32)
    o_ref[...] = out.astype(o_ref.dtype)


def attention_head(x, wq, wk, wv):
    """x: (B, L, D); wq/wk/wv: (D, H)  ->  (B, L, H)."""
    B, L, D = x.shape
    H = wq.shape[1]
    wqkv = jnp.concatenate([wq, wk, wv], axis=1)               # (D, 3H)
    return pl.pallas_call(
        attn_head_kernel,
        out_shape=jax.ShapeDtypeStruct((B, L, H), x.dtype),
        grid=(1,),                                             # whole batch in one step
        in_specs=[
            pl.BlockSpec((B, L, D), lambda i: (0, 0, 0)),
            pl.BlockSpec((D, 3 * H), lambda i: (0, 0)),
        ],
        out_specs=pl.BlockSpec((B, L, H), lambda i: (0, 0, 0)),
        compiler_params=pltpu.CompilerParams(
            dimension_semantics=("arbitrary",)),
    )(x, wqkv)


def reference(x, wq, wk, wv):
    """Pure-JAX reference mirroring the PyTorch forward (eval mode)."""
    q = x @ wq
    k = x @ wk
    v = x @ wv
    s = (q @ jnp.swapaxes(k, -2, -1)) * (k.shape[-1] ** -0.5)
    L = x.shape[1]
    msk = jnp.tril(jnp.ones((L, L)))
    s = jnp.where(msk == 0, -jnp.inf, s)
    att = jax.nn.softmax(s, axis=-1)
    return att @ v


if __name__ == "__main__":
    # Module hyperparameters (small, consistent with the forward pass)
    d_model, seq_len, head_size, dropout = 32, 8, 16, 0.0
    B = 2

    key = jax.random.PRNGKey(0)
    kx, kq, kk, kv = jax.random.split(key, 4)

    x = jax.random.normal(kx, (B, seq_len, d_model), dtype=jnp.float32)
    # nn.Linear(d_model, head_size, bias=False).weight has shape (H, D);
    # we store the transpose (D, H) so the kernel does x @ W.
    scale = d_model ** -0.5
    wq = jax.random.uniform(kq, (d_model, head_size), jnp.float32, -scale, scale)
    wk = jax.random.uniform(kk, (d_model, head_size), jnp.float32, -scale, scale)
    wv = jax.random.uniform(kv, (d_model, head_size), jnp.float32, -scale, scale)

    out = attention_head(x, wq, wk, wv)
    out = jax.block_until_ready(out)

    ref = reference(x, wq, wk, wv)
    assert out.shape == (B, seq_len, head_size)
    assert jnp.allclose(out, ref, atol=1e-5, rtol=1e-5)

    print("KERNEL_OK")
</pallas_src>

<mosaic_0001>
module attributes {stable_mosaic.version = 11 : i64} {
  func.func @attn_head_kernel(%arg0: i32, %arg1: memref<2x8x32xf32, #tpu.memory_space<vmem>>, %arg2: memref<32x48xf32, #tpu.memory_space<vmem>>, %arg3: memref<2x8x16xf32, #tpu.memory_space<vmem>>) attributes {dimension_semantics = [#tpu.dimension_semantics<arbitrary>], iteration_bounds = array<i64: 1>, scalar_prefetch = 0 : i64, scratch_operands = 0 : i64, tpu.core_type = #tpu.core_type<tc>, window_params = [{pipeline_mode = #tpu.pipeline_mode<synchronous>, transform_indices = @transform_0, window_bounds = array<i64: 2, 8, 32>}, {pipeline_mode = #tpu.pipeline_mode<synchronous>, transform_indices = @transform_1, window_bounds = array<i64: 32, 48>}, {pipeline_mode = #tpu.pipeline_mode<synchronous>, transform_indices = @transform_2, window_bounds = array<i64: 2, 8, 16>}]} {
    %c0 = arith.constant 0 : index
    %c0_0 = arith.constant 0 : index
    %c0_1 = arith.constant 0 : index
    %0 = vector.load %arg1[%c0, %c0_0, %c0_1] : memref<2x8x32xf32, #tpu.memory_space<vmem>>, vector<2x8x32xf32>
    %c0_2 = arith.constant 0 : index
    %c0_3 = arith.constant 0 : index
    %1 = vector.load %arg2[%c0_2, %c0_3] : memref<32x48xf32, #tpu.memory_space<vmem>>, vector<32x48xf32>
    %2 = vector.shape_cast %0 : vector<2x8x32xf32> to vector<16x32xf32>
    %cst = arith.constant dense<0.000000e+00> : vector<16x48xf32>
    %3 = tpu.matmul %2, %1, %cst {dimension_numbers = #tpu.dot_dimension_numbers<[1], [0], [0], [1], [0, 0, 1, 1], [], []>} : vector<16x32xf32>, vector<32x48xf32>, vector<16x48xf32> -> vector<16x48xf32>
    %4 = vector.shape_cast %3 : vector<16x48xf32> to vector<2x8x48xf32>
    %5 = vector.extract_strided_slice %4 {offsets = [0, 0, 0], sizes = [2, 8, 16], strides = [1, 1, 1]} : vector<2x8x48xf32> to vector<2x8x16xf32>
    %6 = vector.extract_strided_slice %4 {offsets = [0, 0, 16], sizes = [2, 8, 16], strides = [1, 1, 1]} : vector<2x8x48xf32> to vector<2x8x16xf32>
    %7 = vector.extract_strided_slice %4 {offsets = [0, 0, 32], sizes = [2, 8, 16], strides = [1, 1, 1]} : vector<2x8x48xf32> to vector<2x8x16xf32>
    "tpu.trace_start"() <{level = 10 : i32, message = "bqh,bkh->bqk"}> : () -> ()
    %cst_4 = arith.constant dense<0.000000e+00> : vector<2x8x8xf32>
    %8 = tpu.matmul %5, %6, %cst_4 {dimension_numbers = #tpu.dot_dimension_numbers<[2], [2], [1], [1], [0, 0, 0, 1, 1, 1], [0], [0]>} : vector<2x8x16xf32>, vector<2x8x16xf32>, vector<2x8x8xf32> -> vector<2x8x8xf32>
    "tpu.trace_stop"() : () -> ()
    %cst_5 = arith.constant 2.500000e-01 : f32
    %9 = vector.broadcast %cst_5 : f32 to vector<2x8x8xf32>
    %10 = arith.mulf %8, %9 : vector<2x8x8xf32>
    %11 = tpu.iota {dimensions = array<i32: 0>} : vector<8x8xi32>
    %12 = tpu.iota {dimensions = array<i32: 1>} : vector<8x8xi32>
    %13 = arith.cmpi sle, %12, %11 : vector<8x8xi32>
    %cst_6 = arith.constant 0.000000e+00 : f32
    %cst_7 = arith.constant -1.000000e+30 : f32
    %14 = vector.broadcast %cst_6 : f32 to vector<8x8xf32>
    %15 = vector.broadcast %cst_7 : f32 to vector<8x8xf32>
    %16 = arith.select %13, %14, %15 : vector<8x8xi1>, vector<8x8xf32>
    %17 = vector.shape_cast %16 : vector<8x8xf32> to vector<1x8x8xf32>
    %18 = vector.broadcast %17 : vector<1x8x8xf32> to vector<2x8x8xf32>
    %19 = arith.addf %10, %18 : vector<2x8x8xf32>
    %cst_8 = arith.constant dense<0xFF800000> : vector<2x8xf32>
    %20 = vector.multi_reduction <maximumf>, %19, %cst_8 [2] : vector<2x8x8xf32> to vector<2x8xf32>
    %21 = vector.shape_cast %20 : vector<2x8xf32> to vector<2x8x1xf32>
    %22 = vector.broadcast %21 : vector<2x8x1xf32> to vector<2x8x8xf32>
    %23 = arith.subf %19, %22 : vector<2x8x8xf32>
    %24 = math.exp %23 : vector<2x8x8xf32>
    %cst_9 = arith.constant dense<0.000000e+00> : vector<2x8xf32>
    %25 = vector.multi_reduction <add>, %24, %cst_9 [2] : vector<2x8x8xf32> to vector<2x8xf32>
    %26 = vector.shape_cast %25 : vector<2x8xf32> to vector<2x8x1xf32>
    %27 = tpu.reciprocal %26 : vector<2x8x1xf32> -> vector<2x8x1xf32>
    %28 = vector.broadcast %27 : vector<2x8x1xf32> to vector<2x8x8xf32>
    %29 = arith.mulf %24, %28 : vector<2x8x8xf32>
    "tpu.trace_start"() <{level = 10 : i32, message = "bqk,bkh->bqh"}> : () -> ()
    %cst_10 = arith.constant dense<0.000000e+00> : vector<2x8x16xf32>
    %30 = tpu.matmul %29, %7, %cst_10 {dimension_numbers = #tpu.dot_dimension_numbers<[2], [1], [1], [2], [0, 0, 0, 1, 1, 2], [0], [0]>} : vector<2x8x8xf32>, vector<2x8x16xf32>, vector<2x8x16xf32> -> vector<2x8x16xf32>
    "tpu.trace_stop"() : () -> ()
    %c0_11 = arith.constant 0 : index
    %c0_12 = arith.constant 0 : index
    %c0_13 = arith.constant 0 : index
    %31 = vector.load %arg3[%c0_11, %c0_12, %c0_13] : memref<2x8x16xf32, #tpu.memory_space<vmem>>, vector<2x8x16xf32>
    tpu.vector_store %arg3[%c0_11, %c0_12, %c0_13], %30 {strides = array<i32>} : memref<2x8x16xf32, #tpu.memory_space<vmem>>, vector<2x8x16xf32>,
    return
  }
  func.func @transform_0(%arg0: i32) -> (i32, i32, i32) {
    %c0_i32 = arith.constant 0 : i32
    %c0_i32_0 = arith.constant 0 : i32
    %c0_i32_1 = arith.constant 0 : i32
    %c0_i32_2 = arith.constant 0 : i32
    return %c0_i32, %c0_i32_0, %c0_i32_1 : i32, i32, i32
  }
  func.func @transform_1(%arg0: i32) -> (i32, i32) {
    %c0_i32 = arith.constant 0 : i32
    %c0_i32_0 = arith.constant 0 : i32
    %c0_i32_1 = arith.constant 0 : i32
    return %c0_i32, %c0_i32_0 : i32, i32
  }
  func.func @transform_2(%arg0: i32) -> (i32, i32, i32) {
    %c0_i32 = arith.constant 0 : i32
    %c0_i32_0 = arith.constant 0 : i32
    %c0_i32_1 = arith.constant 0 : i32
    %c0_i32_2 = arith.constant 0 : i32
    return %c0_i32, %c0_i32_0, %c0_i32_1 : i32, i32, i32
  }
}

</mosaic_0001>

<llo_original>
// kernel: tpu_custom_call.1
$region0: #{tpu_custom_call.1}
  #allocation0 [shape = 'u32[]', space=smem, size = 0x4, offset = 0x4, fixed_abs, tag = 'smem constant byte address 0x4 - core index']
  #allocation1 [shape = 'u32[72,128]{1,0:T(1,128)}', space=vmem, size = 0x9000, scoped, tag = 'internal scratch']
  %s0 = inlined_call_operand.hbm [shape: f32[2,8,32], index: 0, kind: input, shape index: {}]
  %s1 = inlined_call_operand.hbm [shape: f32[32,48], index: 1, kind: input, shape index: {}]
  %s2 = inlined_call_operand.hbm [shape: f32[2,8,16], index: 2, kind: output, shape index: {}]
  %s3 = sld [smem:[#allocation0]]
  $region26: #{tpu_custom_call.1} parent=0
    _
  %s5 = ssub.s32 1, %s3
  %s6 = scalar_select 0, %s5, %s3
  $region1: #{tpu_custom_call.1} parent=0
    #allocation2 [shape = 'u8[8192]{0}', space=vmem, size = 0x2000, scoped, tag = 'input window, operand 0, single buffered']
    #allocation3 [shape = 's32[1]{0}', space=sflag, size = 0x4, scoped, tag = 'scoped memory for tpu_custom_call.1']
    #allocation4 [shape = 's32[1]{0}', space=sflag, size = 0x4, scoped, tag = 'scoped memory for tpu_custom_call.1']
    #allocation5 [shape = 'u8[16384]{0}', space=vmem, size = 0x4000, scoped, tag = 'input window, operand 1, single buffered']
    #allocation6 [shape = 's32[1]{0}', space=sflag, size = 0x4, scoped, tag = 'scoped memory for tpu_custom_call.1']
    #allocation7 [shape = 'u8[8192]{0}', space=vmem, size = 0x2000, scoped, tag = 'output window, operand 0, single buffered']
    %7 = vsyncpa [#allocation3], 0
    %8 = vsyncpa [#allocation6], 0
    %9 = vsyncpa [#allocation4], 0
    // Predicated region
    $region2: #{tpu_custom_call.1} parent=1 // pred_check
      _
    $region3: #{tpu_custom_call.1} parent=1 // pred_check_branch
      %11 = sbr.rel (0) target = $region5
    $region4: #{tpu_custom_call.1} parent=1 // pred_region
      %13 = vsyncadd [#allocation3], 0
      %s14 = sshll.u32 %s0, 4
      %s15 = int_to_ptr.hbm [resolvable:$true] %s14
      %s16 = sshll.u32 [#allocation2], 4
      %s17 = int_to_ptr.vmem [resolvable:$true] %s16
      %22 = dma.hbm_to_vmem [thread:$0]  %s15, 256, %s17, [#allocation3], 128, 128, 8
    $region5: #{tpu_custom_call.1} parent=1 // pred_fallthru
      _
    // Predicated region
    $region6: #{tpu_custom_call.1} parent=1 // pred_check
      _
    $region7: #{tpu_custom_call.1} parent=1 // pred_check_branch
      %24 = sbr.rel (0) target = $region9
    $region8: #{tpu_custom_call.1} parent=1 // pred_region
      %26 = vsyncadd [#allocation6], 0
      %s27 = sshll.u32 %s1, 4
      %s28 = int_to_ptr.hbm [resolvable:$true] %s27
      %s29 = sshll.u32 [#allocation5], 4
      %s30 = int_to_ptr.vmem [resolvable:$true] %s29
      %35 = dma.hbm_to_vmem [thread:$0]  %s28, 512, %s30, [#allocation6], 128, 128, 8
    $region9: #{tpu_custom_call.1} parent=1 // pred_fallthru
      _
    // Predicated region
    $region10: #{tpu_custom_call.1} parent=1 // pred_check
      _
    $region11: #{tpu_custom_call.1} parent=1 // pred_check_branch
      %37 = sbr.rel (0) target = $region13
    $region12: #{tpu_custom_call.1} parent=1 // pred_region
      %39 = dma.done [#allocation3], 256
    $region13: #{tpu_custom_call.1} parent=1 // pred_fallthru
      _
    // Predicated region
    $region14: #{tpu_custom_call.1} parent=1 // pred_check
      _
    $region15: #{tpu_custom_call.1} parent=1 // pred_check_branch
      %41 = sbr.rel (0) target = $region17
    $region16: #{tpu_custom_call.1} parent=1 // pred_region
      %43 = dma.done [#allocation6], 512
    $region17: #{tpu_custom_call.1} parent=1 // pred_fallthru
      _
    %v44 = vld [vmem:[#allocation2] sm:$0xff]
    %v45 = vld [vmem:[#allocation2 + $0x8] sm:$0xff]
    %v46 = vld [vmem:[#allocation5] sm:$0xff]
    %v47 = vld [vmem:[#allocation5 + $0x8] sm:$0xff]
    %v48 = vld [vmem:[#allocation5 + $0x10] sm:$0xff]
    %v49 = vld [vmem:[#allocation5 + $0x18] sm:$0xff]
    %vm50 = vcmask 261120
    %v52 = vsel %vm50, %v44, 0
    %v55 = vsel %vm50, %v45, 0
    %57 = vmatpush.msra.mxu0 0.0
    %58 = vmatpush.msra.mxu0 0.0
    %59 = vmatpush.msra.mxu0 0.0
    %60 = vmatpush.msra.mxu0 0.0
    %61 = vmatpush.msra.mxu0 0.0
    %62 = vmatpush.msra.mxu0 0.0
    %63 = vmatpush.msra.mxu0 0.0
    %64 = vmatpush.msra.mxu0 0.0
    %65 = vmatpush.msra.mxu0 0.0
    %66 = vmatpush.msra.mxu0 0.0
    %67 = vmatpush.msra.mxu0 0.0
    %68 = vmatpush.msra.mxu0 0.0
    %69 = vmatpush.msra.mxu0 %v49
    %70 = vmatpush.msra.mxu0 %v48
    %71 = vmatpush.msra.mxu0 %v47
    %72 = vmatpush.msra.mxu0 %v46
    %73 = vmatmul.f32.gmra.mxu0 %v52
    %v74 = vpop.f32.mrf.mxu0
    %v75 = vadd.f32 0.0, %v74
    %76 = vmatmul.f32.gmra.mxu0 %v55
    %v77 = vpop.f32.mrf.mxu0
    %v78 = vadd.f32 0.0, %v77
    %79 = vdwg.mxu0
    %81 = vrot.lane.b32.xlu0 %v75, 112
    %v82 = vpop.permute.xlu0 %81
    %vm83 = vcmask 130048
    %v84 = vsel %vm83, %v75, 0
    %v86 = vsel %vm83, %v82, 0
    %88 = vmatpush.xpose.msra.mxu0 0.0
    %89 = vmatpush.xpose.msra.mxu0 0.0
    %90 = vmatpush.xpose.msra.mxu0 0.0
    %91 = vmatpush.xpose.msra.mxu0 0.0
    %92 = vmatpush.xpose.msra.mxu0 0.0
    %93 = vmatpush.xpose.msra.mxu0 0.0
    %94 = vmatpush.xpose.msra.mxu0 0.0
    %95 = vmatpush.xpose.msra.mxu0 0.0
    %96 = vmatpush.xpose.msra.mxu0 0.0
    %97 = vmatpush.xpose.msra.mxu0 0.0
    %98 = vmatpush.xpose.msra.mxu0 0.0
    %99 = vmatpush.xpose.msra.mxu0 0.0
    %100 = vmatpush.xpose.msra.mxu0 0.0
    %101 = vmatpush.xpose.msra.mxu0 0.0
    %102 = vmatpush.xpose.msra.mxu0 0.0
    %103 = vmatpush.xpose.msra.mxu0 %v86
    %104 = vmatmul.f32.gmra.mxu0 %v84
    %v105 = vpop.f32.mrf.mxu0
    %v106 = vadd.f32 0.0, %v105
    %107 = vdwg.mxu0
    %109 = vrot.lane.b32.xlu0 %v78, 112
    %v110 = vpop.permute.xlu0 %109
    %v111 = vsel %vm83, %v78, 0
    %v113 = vsel %vm83, %v110, 0
    %115 = vmatpush.xpose.msra.mxu0 0.0
    %116 = vmatpush.xpose.msra.mxu0 0.0
    %117 = vmatpush.xpose.msra.mxu0 0.0
    %118 = vmatpush.xpose.msra.mxu0 0.0
    %119 = vmatpush.xpose.msra.mxu0 0.0
    %120 = vmatpush.xpose.msra.mxu0 0.0
    %121 = vmatpush.xpose.msra.mxu0 0.0
    %122 = vmatpush.xpose.msra.mxu0 0.0
    %123 = vmatpush.xpose.msra.mxu0 0.0
    %124 = vmatpush.xpose.msra.mxu0 0.0
    %125 = vmatpush.xpose.msra.mxu0 0.0
    %126 = vmatpush.xpose.msra.mxu0 0.0
    %127 = vmatpush.xpose.msra.mxu0 0.0
    %128 = vmatpush.xpose.msra.mxu0 0.0
    %129 = vmatpush.xpose.msra.mxu0 0.0
    %130 = vmatpush.xpose.msra.mxu0 %v113
    %131 = vmatmul.f32.gmra.mxu0 %v111
    %v132 = vpop.f32.mrf.mxu0
    %v133 = vadd.f32 0.0, %v132
    %134 = vdwg.mxu0
    %v135 = vmul.f32 %v106, 0.25
    %v136 = vmul.f32 %v133, 0.25
    %v137 = vlaneseq
    %v138 = vshrl.u32 %v137, 7
    %v139 = vlaneseq
    %v140 = vand.u32 %v139, 127
    %vm141 = vcmp.le.s32.totalorder %v140, %v138
    %v142 = vsel %vm141, 0.0, -1e+30
    %v143 = vadd.f32 %v135, %v142
    %v144 = vadd.f32 %v136, %v142
    %vm145 = vcmask 64512
    %v146 = vsel %vm145, %v143, -inf
    %147 = vmax.xlane.f32.xlu0 %v146
    %v148 = vpop.xlane.xlu0 %147
    %v149 = vsel %vm145, %v144, -inf
    %150 = vmax.xlane.f32.xlu0 %v149
    %v151 = vpop.xlane.xlu0 %150
    %v152 = vsub.f32 %v143, %v148
    %v153 = vsub.f32 %v144, %v151
    %v154 = vmul.f32 %v152, 1.442695
    %v155 = vpow.pop %v154
    %v156 = vmul.f32 %v153, 1.442695
    %v157 = vpow.pop %v156
    %v158 = vsel %vm145, %v155, 0.0
    %159 = vadd.xlane.f32.xlu0 %v158
    %v160 = vpop.xlane.xlu0 %159
    %v161 = vsel %vm145, %v157, 0.0
    %162 = vadd.xlane.f32.xlu0 %v161
    %v163 = vpop.xlane.xlu0 %162
    %v164 = vrcp.pop %v160
    %v165 = vmul.f32 %v160, %v164
    %v166 = vsub.f32 1.0, %v165
    %v167 = vmul.f32 %v164, %v166
    %v168 = vadd.f32 %v164, %v167
    %vm169 = vweird.f32 %v160
    %vm170 = vweird.f32 %v164
    %vm171 = vmor %vm169, %vm170
    %v172 = vsel %vm171, %v164, %v168
    %v173 = vand.u32 2147483647, %v160
    %vm174 = vcmp.eq.f32.partialorder %v173, 8.507059e+37
    %v175 = vand.u32 %v160, 2147483648
    %v176 = vor.u32 1.1754944e-38, %v175
    %v177 = vsel %vm174, %v176, %v172
    %v178 = vrcp.pop %v163
    %v179 = vmul.f32 %v163, %v178
    %v180 = vsub.f32 1.0, %v179
    %v181 = vmul.f32 %v178, %v180
    %v182 = vadd.f32 %v178, %v181
    %vm183 = vweird.f32 %v163
    %vm184 = vweird.f32 %v178
    %vm185 = vmor %vm183, %vm184
    %v186 = vsel %vm185, %v178, %v182
    %v187 = vand.u32 2147483647, %v163
    %vm188 = vcmp.eq.f32.partialorder %v187, 8.507059e+37
    %v189 = vand.u32 %v163, 2147483648
    %v190 = vor.u32 1.1754944e-38, %v189
    %v191 = vsel %vm188, %v190, %v186
    %v192 = vmul.f32 %v155, %v177
    %v193 = vmul.f32 %v157, %v191
    %194 = vrot.lane.b32.xlu0 %v75, 96
    %v195 = vpop.permute.xlu0 %194
    %v198 = vsel %vm145, %v192, 0
    %200 = vmatpush.msra.mxu0 0.0
    %201 = vmatpush.msra.mxu0 0.0
    %202 = vmatpush.msra.mxu0 0.0
    %203 = vmatpush.msra.mxu0 0.0
    %204 = vmatpush.msra.mxu0 0.0
    %205 = vmatpush.msra.mxu0 0.0
    %206 = vmatpush.msra.mxu0 0.0
    %207 = vmatpush.msra.mxu0 0.0
    %208 = vmatpush.msra.mxu0 0.0
    %209 = vmatpush.msra.mxu0 0.0
    %210 = vmatpush.msra.mxu0 0.0
    %211 = vmatpush.msra.mxu0 0.0
    %212 = vmatpush.msra.mxu0 0.0
    %213 = vmatpush.msra.mxu0 0.0
    %214 = vmatpush.msra.mxu0 0.0
    %215 = vmatpush.msra.mxu0 %v195
    %216 = vmatmul.f32.gmra.mxu0 %v198
    %v217 = vpop.f32.mrf.mxu0
    %v218 = vadd.f32 0.0, %v217
    %219 = vdwg.mxu0
    %220 = vrot.lane.b32.xlu0 %v78, 96
    %v221 = vpop.permute.xlu0 %220
    %v224 = vsel %vm145, %v193, 0
    %226 = vmatpush.msra.mxu0 0.0
    %227 = vmatpush.msra.mxu0 0.0
    %228 = vmatpush.msra.mxu0 0.0
    %229 = vmatpush.msra.mxu0 0.0
    %230 = vmatpush.msra.mxu0 0.0
    %231 = vmatpush.msra.mxu0 0.0
    %232 = vmatpush.msra.mxu0 0.0
    %233 = vmatpush.msra.mxu0 0.0
    %234 = vmatpush.msra.mxu0 0.0
    %235 = vmatpush.msra.mxu0 0.0
    %236 = vmatpush.msra.mxu0 0.0
    %237 = vmatpush.msra.mxu0 0.0
    %238 = vmatpush.msra.mxu0 0.0
    %239 = vmatpush.msra.mxu0 0.0
    %240 = vmatpush.msra.mxu0 0.0
    %241 = vmatpush.msra.mxu0 %v221
    %242 = vmatmul.f32.gmra.mxu0 %v224
    %v243 = vpop.f32.mrf.mxu0
    %v244 = vadd.f32 0.0, %v243
    %245 = vdwg.mxu0
    %246 = vst.msk [vmem:[#allocation7] sm:$0xff] %vm83, %v218
    %247 = vst.msk [vmem:[#allocation7 + $0x8] sm:$0xff] %vm83, %v244
    // Predicated region
    $region18: #{tpu_custom_call.1} parent=1 // pred_check
      _
    $region19: #{tpu_custom_call.1} parent=1 // pred_check_branch
      %249 = sbr.rel (0) target = $region21
    $region20: #{tpu_custom_call.1} parent=1 // pred_region
      %251 = vsyncadd [#allocation4], 0
      %s252 = sshll.u32 [#allocation7], 4
      %s253 = int_to_ptr.vmem [resolvable:$true] %s252
      %s254 = sshll.u32 %s2, 4
      %s255 = int_to_ptr.hbm [resolvable:$true] %s254
      %260 = dma.vmem_to_hbm [thread:$0]  %s253, 256, %s255, [#allocation4], 128, 128, 8
    $region21: #{tpu_custom_call.1} parent=1 // pred_fallthru
      _
    // Predicated region
    $region22: #{tpu_custom_call.1} parent=1 // pred_check
      _
    $region23: #{tpu_custom_call.1} parent=1 // pred_check_branch
      %262 = sbr.rel (0) target = $region25
    $region24: #{tpu_custom_call.1} parent=1 // pred_region
      %264 = dma.done [#allocation4], 256
    $region25: #{tpu_custom_call.1} parent=1 // pred_fallthru
      _
    %265 = vsyncpa [#allocation3], 1
    %266 = vsyncpa [#allocation6], 1
    %267 = vsyncpa [#allocation4], 1

</llo_original>
